<compile_context>
chip_gen: v7x
topology: tpu7x:2x2x1
jax: 0.10.0
libtpu: 0.0.40
codegen_flags: <defaults>
</compile_context>

<pallas_src>
import functools

import jax
import jax.numpy as jnp
from jax import lax
from jax.experimental import pallas as pl
from jax.experimental.pallas import tpu as pltpu


def _bce_kernel(x_ref, tgt_ref, w_ref, out_ref, acc_ref, *, n_rows, n_inner,
                inv_denom):
    # x_ref:   (TILE_N, C)   probabilities (native dtype, cast to f32 here)
    # tgt_ref: (TILE_N, K)   int32 class indices
    # w_ref:   (1, C)        per-class weights (used only in finalize)
    # out_ref: (1, 8, 128)   per-split partial loss, broadcast-filled
    # acc_ref: (8, C)        f32 running unweighted clamped-log column sums
    split = pl.program_id(0)        # core-split axis ("parallel")
    i = pl.program_id(1)            # row-tile axis within split ("arbitrary")

    @pl.when(i == 0)
    def _():
        acc_ref[...] = jnp.zeros_like(acc_ref)

    x = x_ref[...].astype(jnp.float32)              # (TILE_N, C)
    tgt = tgt_ref[...]                              # (TILE_N, K)
    tile_n, n_cols = x.shape
    k_cnt = tgt.shape[1]

    # target = zeros_like(output).scatter_(1, target, 1) -> multi-hot
    col_ids = lax.broadcasted_iota(jnp.int32, (tile_n, n_cols), 1)
    onehot = col_ids == tgt[:, 0:1]
    for k in range(1, k_cnt):                       # K tiny and static
        onehot = onehot | (col_ids == tgt[:, k:k + 1])

    # Single log per element (PyTorch BCELoss clamps logs at -100).
    arg = jnp.where(onehot, x, 1.0 - x)
    val = jnp.maximum(jnp.log(arg), -100.0)

    # Ragged-tile row mask; MUST precede accumulation (garbage rows -> 0).
    tile_idx = split * n_inner + i
    row_ids = tile_idx * tile_n + lax.broadcasted_iota(
        jnp.int32, (tile_n, 1), 0)
    val = jnp.where(row_ids < n_rows, val, 0.0)

    # vreg-aligned accumulation into an (8, C) accumulator.
    if tile_n % 8 == 0:
        acc_ref[...] += val.reshape(tile_n // 8, 8, n_cols).sum(axis=0)
    else:  # only when N < 8 (block == full dim)
        acc_ref[0:1, :] += jnp.sum(val, axis=0, keepdims=True)

    @pl.when(i == pl.num_programs(1) - 1)
    def _():
        w = w_ref[...].astype(jnp.float32)          # (1, C)
        partial = -jnp.sum(acc_ref[...] * w) * inv_denom
        out_ref[...] = jnp.broadcast_to(partial, out_ref.shape).astype(
            out_ref.dtype)


def _vmem_capacity_bytes(default=64 * 1024 * 1024):
    try:
        return int(getattr(pltpu.get_tpu_info(), "vmem_capacity_bytes", default))
    except Exception:
        return default


def my_bce_loss(output, target_idx, weight, *, tile_n=None):
    """output: (N, C) probs in (0,1); target_idx: (N, K) int; weight: (C,).
    Returns scalar mean weighted BCE loss (f32), matching PyTorch MyBCELoss."""
    n, c = output.shape
    k = target_idx.shape[1]
    c_lane = ((c + 127) // 128) * 128               # lane-padded VMEM width

    # VMEM-aware sizing: 128-MiB parts (v5e/v6e) -> 64 MiB limit, larger tiles;
    # 64-MiB parts (v7x) -> 48 MiB limit, smaller tiles.
    vmem_cap = _vmem_capacity_bytes()
    vmem_limit = min((3 * vmem_cap) // 4, 64 * 1024 * 1024)

    if tile_n is None:
        # Probs-tile byte budget (~1/12 of the limit leaves room for the
        # double-buffered inputs, the lane-padded target buffer and f32 temps).
        budget = vmem_limit // 12
        tile_n = max(8, (budget // (c_lane * 4)) // 8 * 8)
    if n >= 8:
        tile_n = min(tile_n, (n // 8) * 8)
        tile_n = max(8, (tile_n // 8) * 8)
    else:
        tile_n = n                                   # block == full dim

    n_tiles = pl.cdiv(n, tile_n)
    n_split = 2 if n_tiles >= 2 else 1               # v7x: one split per TC
    n_inner = pl.cdiv(n_tiles, n_split)

    tgt = (target_idx if target_idx.dtype == jnp.int32
           else target_idx.astype(jnp.int32))
    w = weight.astype(jnp.float32).reshape(1, c)

    def row_map(s, i):
        # Clamp phantom tiles (odd tile counts) to a valid block; the row mask
        # inside the kernel zeroes their contribution.
        return (jnp.minimum(s * n_inner + i, n_tiles - 1), 0)

    kernel = functools.partial(
        _bce_kernel, n_rows=n, n_inner=n_inner, inv_denom=1.0 / float(n * c))

    out = pl.pallas_call(
        kernel,
        out_shape=jax.ShapeDtypeStruct((n_split, 8, 128), jnp.float32),
        grid=(n_split, n_inner),
        in_specs=[
            pl.BlockSpec((tile_n, c), row_map),       # probs (no padding)
            pl.BlockSpec((tile_n, k), row_map),       # target indices
            pl.BlockSpec((1, c), lambda s, i: (0, 0)),  # weights (resident)
        ],
        out_specs=pl.BlockSpec((1, 8, 128), lambda s, i: (s, 0, 0)),
        scratch_shapes=[pltpu.VMEM((8, c), jnp.float32)],
        compiler_params=pltpu.CompilerParams(
            dimension_semantics=("parallel", "arbitrary"),
            vmem_limit_bytes=int(vmem_limit),
        ),
    )(output, tgt, w)

    # One broadcast-filled partial per split; sum the splits.
    return jnp.sum(out[:, 0, 0])


if __name__ == "__main__":
    key = jax.random.PRNGKey(0)
    N, C, K = 8, 32, 1

    k1, k2 = jax.random.split(key)
    # Probabilities strictly in (0, 1), as nn.BCELoss expects (post-sigmoid).
    logits = jax.random.normal(k1, (N, C), dtype=jnp.float32)
    output = jax.nn.sigmoid(logits)
    # Class indices to scatter along dim 1.
    target = jax.random.randint(k2, (N, K), 0, C, dtype=jnp.int32)
    # Deterministic per-class weights.
    weight = jnp.linspace(0.5, 1.5, C, dtype=jnp.float32)

    loss = my_bce_loss(output, target, weight)
    jax.block_until_ready(loss)

    # Pure-JAX reference of the PyTorch module's math.
    y_ref = jnp.zeros((N, C), jnp.float32).at[
        jnp.arange(N)[:, None], target].set(1.0)
    ref = jnp.mean(
        -weight[None, :]
        * (y_ref * jnp.maximum(jnp.log(output), -100.0)
           + (1.0 - y_ref) * jnp.maximum(jnp.log1p(-output), -100.0)))
    assert jnp.allclose(loss, ref, rtol=1e-5, atol=1e-5), (loss, ref)

    print("KERNEL_OK")
</pallas_src>

<mosaic_0001>
module attributes {stable_mosaic.version = 11 : i64} {
  func.func @_bce_kernel(%arg0: i32, %arg1: i32, %arg2: memref<8x32xf32, #tpu.memory_space<vmem>>, %arg3: memref<8x1xi32, #tpu.memory_space<vmem>>, %arg4: memref<1x32xf32, #tpu.memory_space<vmem>>, %arg5: memref<1x8x128xf32, #tpu.memory_space<vmem>>, %arg6: memref<8x32xf32, #tpu.memory_space<vmem>>) attributes {dimension_semantics = [#tpu.dimension_semantics<parallel>, #tpu.dimension_semantics<arbitrary>], iteration_bounds = array<i64: 1, 1>, scalar_prefetch = 0 : i64, scratch_operands = 1 : i64, tpu.core_type = #tpu.core_type<tc>, window_params = [{transform_indices = @transform_0, window_bounds = array<i64: 8, 32>}, {transform_indices = @transform_1, window_bounds = array<i64: 8, 1>}, {pipeline_mode = #tpu.pipeline_mode<synchronous>, transform_indices = @transform_2, window_bounds = array<i64: 1, 32>}, {transform_indices = @transform_3, window_bounds = array<i64: 1, 8, 128>}]} {
    %c0_i32 = arith.constant 0 : i32
    %0 = arith.cmpi eq, %arg1, %c0_i32 : i32
    %1 = arith.extui %0 : i1 to i32
    %c0_i32_0 = arith.constant 0 : i32
    %2 = arith.cmpi ne, %1, %c0_i32_0 : i32
    scf.if %2 {
      %cst_14 = arith.constant 0.000000e+00 : f32
      %34 = vector.broadcast %cst_14 : f32 to vector<8x32xf32>
      %c0_15 = arith.constant 0 : index
      %c0_16 = arith.constant 0 : index
      %35 = vector.load %arg6[%c0_15, %c0_16] : memref<8x32xf32, #tpu.memory_space<vmem>>, vector<8x32xf32>
      tpu.vector_store %arg6[%c0_15, %c0_16], %34 {strides = array<i32>} : memref<8x32xf32, #tpu.memory_space<vmem>>, vector<8x32xf32>,
    } else {
    }
    %c0 = arith.constant 0 : index
    %c0_1 = arith.constant 0 : index
    %3 = vector.load %arg2[%c0, %c0_1] : memref<8x32xf32, #tpu.memory_space<vmem>>, vector<8x32xf32>
    %c0_2 = arith.constant 0 : index
    %c0_3 = arith.constant 0 : index
    %4 = vector.load %arg3[%c0_2, %c0_3] : memref<8x1xi32, #tpu.memory_space<vmem>>, vector<8x1xi32>
    %5 = tpu.iota {dimensions = array<i32: 1>} : vector<8x32xi32>
    %6 = vector.broadcast %4 : vector<8x1xi32> to vector<8x32xi32>
    %7 = arith.cmpi eq, %5, %6 : vector<8x32xi32>
    %cst = arith.constant 1.000000e+00 : f32
    %8 = vector.broadcast %cst : f32 to vector<8x32xf32>
    %9 = arith.subf %8, %3 : vector<8x32xf32>
    %10 = arith.select %7, %3, %9 : vector<8x32xi1>, vector<8x32xf32>
    %11 = math.log %10 : vector<8x32xf32>
    %cst_4 = arith.constant -1.000000e+02 : f32
    %12 = vector.broadcast %cst_4 : f32 to vector<8x32xf32>
    %13 = arith.maximumf %11, %12 : vector<8x32xf32>
    %c1_i32 = arith.constant 1 : i32
    %14 = arith.muli %arg0, %c1_i32 : i32
    %15 = arith.addi %14, %arg1 : i32
    %c8_i32 = arith.constant 8 : i32
    %16 = arith.muli %15, %c8_i32 : i32
    %17 = tpu.iota {dimensions = array<i32: 0>} : vector<8x1xi32>
    %18 = vector.broadcast %16 : i32 to vector<8x1xi32>
    %19 = arith.addi %18, %17 : vector<8x1xi32>
    %c8_i32_5 = arith.constant 8 : i32
    %20 = vector.broadcast %c8_i32_5 : i32 to vector<8x1xi32>
    %21 = arith.cmpi slt, %19, %20 : vector<8x1xi32>
    %cst_6 = arith.constant 0.000000e+00 : f32
    %22 = vector.shape_cast %21 : vector<8x1xi1> to vector<8x1xi1>
    %23 = vector.broadcast %22 : vector<8x1xi1> to vector<8x32xi1>
    %24 = vector.broadcast %cst_6 : f32 to vector<8x32xf32>
    %25 = arith.select %23, %13, %24 : vector<8x32xi1>, vector<8x32xf32>
    %c0_7 = arith.constant 0 : index
    %c0_8 = arith.constant 0 : index
    %26 = vector.load %arg6[%c0_7, %c0_8] : memref<8x32xf32, #tpu.memory_space<vmem>>, vector<8x32xf32>
    %27 = vector.shape_cast %25 : vector<8x32xf32> to vector<1x8x32xf32>
    %cst_9 = arith.constant dense<0.000000e+00> : vector<8x32xf32>
    %28 = vector.multi_reduction <add>, %27, %cst_9 [0] : vector<1x8x32xf32> to vector<8x32xf32>
    %29 = arith.addf %26, %28 : vector<8x32xf32>
    %c0_10 = arith.constant 0 : index
    %c0_11 = arith.constant 0 : index
    %30 = vector.load %arg6[%c0_10, %c0_11] : memref<8x32xf32, #tpu.memory_space<vmem>>, vector<8x32xf32>
    tpu.vector_store %arg6[%c0_10, %c0_11], %29 {strides = array<i32>} : memref<8x32xf32, #tpu.memory_space<vmem>>, vector<8x32xf32>,
    %c0_i32_12 = arith.constant 0 : i32
    %31 = arith.cmpi eq, %arg1, %c0_i32_12 : i32
    %32 = arith.extui %31 : i1 to i32
    %c0_i32_13 = arith.constant 0 : i32
    %33 = arith.cmpi ne, %32, %c0_i32_13 : i32
    scf.if %33 {
      %c0_14 = arith.constant 0 : index
      %c0_15 = arith.constant 0 : index
      %34 = vector.load %arg4[%c0_14, %c0_15] : memref<1x32xf32, #tpu.memory_space<vmem>>, vector<1x32xf32>
      %c0_16 = arith.constant 0 : index
      %c0_17 = arith.constant 0 : index
      %35 = vector.load %arg6[%c0_16, %c0_17] : memref<8x32xf32, #tpu.memory_space<vmem>>, vector<8x32xf32>
      %36 = vector.broadcast %34 : vector<1x32xf32> to vector<8x32xf32>
      %37 = arith.mulf %35, %36 : vector<8x32xf32>
      %38 = vector.shape_cast %37 : vector<8x32xf32> to vector<1x8x32xf32>
      %cst_18 = arith.constant dense<0.000000e+00> : vector<1xf32>
      %39 = vector.multi_reduction <add>, %38, %cst_18 [1, 2] : vector<1x8x32xf32> to vector<1xf32>
      %40 = vector.shape_cast %39 : vector<1xf32> to vector<1x1x1xf32>
      %41 = vector.extract %40[0, 0, 0] : f32 from vector<1x1x1xf32>
      %cst_19 = arith.constant 0.000000e+00 : f32
      %42 = arith.subf %cst_19, %41 : f32
      %cst_20 = arith.constant 3.906250e-03 : f32
      %43 = arith.mulf %42, %cst_20 : f32
      %44 = vector.broadcast %43 : f32 to vector<1x8x128xf32>
      %c0_21 = arith.constant 0 : index
      %c0_22 = arith.constant 0 : index
      %c0_23 = arith.constant 0 : index
      %45 = vector.load %arg5[%c0_21, %c0_22, %c0_23] : memref<1x8x128xf32, #tpu.memory_space<vmem>>, vector<1x8x128xf32>
      tpu.vector_store %arg5[%c0_21, %c0_22, %c0_23], %44 {strides = array<i32>} : memref<1x8x128xf32, #tpu.memory_space<vmem>>, vector<1x8x128xf32>,
    } else {
    }
    return
  }
  func.func @transform_0(%arg0: i32, %arg1: i32) -> (i32, i32) {
    %c1_i32 = arith.constant 1 : i32
    %0 = arith.muli %arg0, %c1_i32 : i32
    %1 = arith.addi %0, %arg1 : i32
    %c0_i32 = arith.constant 0 : i32
    %2 = arith.minsi %1, %c0_i32 : i32
    %c0_i32_0 = arith.constant 0 : i32
    %c0_i32_1 = arith.constant 0 : i32
    return %2, %c0_i32_0 : i32, i32
  }
  func.func @transform_1(%arg0: i32, %arg1: i32) -> (i32, i32) {
    %c1_i32 = arith.constant 1 : i32
    %0 = arith.muli %arg0, %c1_i32 : i32
    %1 = arith.addi %0, %arg1 : i32
    %c0_i32 = arith.constant 0 : i32
    %2 = arith.minsi %1, %c0_i32 : i32
    %c0_i32_0 = arith.constant 0 : i32
    %c0_i32_1 = arith.constant 0 : i32
    return %2, %c0_i32_0 : i32, i32
  }
  func.func @transform_2(%arg0: i32, %arg1: i32) -> (i32, i32) {
    %c0_i32 = arith.constant 0 : i32
    %c0_i32_0 = arith.constant 0 : i32
    %c0_i32_1 = arith.constant 0 : i32
    return %c0_i32, %c0_i32_0 : i32, i32
  }
  func.func @transform_3(%arg0: i32, %arg1: i32) -> (i32, i32, i32) {
    %c0_i32 = arith.constant 0 : i32
    %c0_i32_0 = arith.constant 0 : i32
    %c0_i32_1 = arith.constant 0 : i32
    return %arg0, %c0_i32, %c0_i32_0 : i32, i32, i32
  }
}

</mosaic_0001>

<llo_original>
// kernel: tpu_custom_call.1
$region0: #{tpu_custom_call.1}
  #allocation0 [shape = 'u32[]', space=smem, size = 0x4, offset = 0x4, fixed_abs, tag = 'smem constant byte address 0x4 - core index']
  #allocation1 [shape = 'u32[144,128]{1,0:T(1,128)}', space=vmem, size = 0x12000, scoped, tag = 'internal scratch']
  #allocation2 [shape = 'f32[8,32]{1,0:T(8,128)}', space=vmem, size = 0x1000, scoped, tag = 'scratch operand']
  %s0 = inlined_call_operand.vmem [shape: f32[8,32], index: 0, kind: input, shape index: {}]
  %s1 = inlined_call_operand.vmem [shape: s32[8,1], index: 1, kind: input, shape index: {}]
  %s2 = inlined_call_operand.vmem [shape: f32[1,32], index: 2, kind: input, shape index: {}]
  %s3 = inlined_call_operand.hbm [shape: f32[1,8,128], index: 3, kind: output, shape index: {}]
  %s4 = sld [smem:[#allocation0]]
  $region30: #{tpu_custom_call.1} parent=0
    _
  %s6 = ssub.s32 1, %s4
  %s7 = scalar_select 0, %s6, %s4
  $region1: #{tpu_custom_call.1} parent=0
    #allocation3 [shape = 'u8[4096]{0}', space=vmem, size = 0x1000, scoped, tag = 'output window, operand 0, single buffered']
    #allocation4 [shape = 's32[1]{0}', space=sflag, size = 0x4, scoped, tag = 'scoped memory for tpu_custom_call.1']
    %8 = vsyncpa [#allocation4], 0
    // Predicated region
    $region2: #{tpu_custom_call.1} parent=1 // pred_check
      _
    $region3: #{tpu_custom_call.1} parent=1 // pred_check_branch
      %10 = sbr.rel (0) target = $region5
    $region4: #{tpu_custom_call.1} parent=1 // pred_region
      %s11 = sadd.s32 0, 0
      %p12 = scmp.lt.s32.totalorder %s11, 0
      %s13 = scalar_select %p12, %s11, 0
      %p14 = scmp.lt.s32.totalorder %s13, 0
      %s15 = scalar_select %p14, %s13, 0
      %s16 = smul.addr %s15, 8
      %s17 = scalar_lea.vmem %s0, %s16
      %s18 = sadd.s32 0, 0
      %p19 = scmp.lt.s32.totalorder %s18, 0
      %s20 = scalar_select %p19, %s18, 0
    $region5: #{tpu_custom_call.1} parent=1 // pred_fallthru
      _
    // Predicated region
    $region6: #{tpu_custom_call.1} parent=1 // pred_check
      _
    $region7: #{tpu_custom_call.1} parent=1 // pred_check_branch
      %22 = sbr.rel (0) target = $region9
    $region8: #{tpu_custom_call.1} parent=1 // pred_region
      %s23 = sadd.s32 0, 0
      %p24 = scmp.lt.s32.totalorder %s23, 0
      %s25 = scalar_select %p24, %s23, 0
      %p26 = scmp.lt.s32.totalorder %s25, 0
      %s27 = scalar_select %p26, %s25, 0
      %s28 = smul.addr %s27, 8
      %s29 = scalar_lea.vmem %s1, %s28
      %s30 = sadd.s32 0, 0
      %p31 = scmp.lt.s32.totalorder %s30, 0
      %s32 = scalar_select %p31, %s30, 0
    $region9: #{tpu_custom_call.1} parent=1 // pred_fallthru
      _
    // Predicated region
    $region10: #{tpu_custom_call.1} parent=1 // pred_check
      _
    $region11: #{tpu_custom_call.1} parent=1 // pred_check_branch
      %34 = sbr.rel (0) target = $region13
    $region12: #{tpu_custom_call.1} parent=1 // pred_region
      _
    $region13: #{tpu_custom_call.1} parent=1 // pred_fallthru
      _
    %s35 = sadd.s32 0, 0
    %p36 = scmp.lt.s32.totalorder %s35, 0
    %s37 = scalar_select %p36, %s35, 0
    %p38 = scmp.lt.s32.totalorder %s37, 0
    %s39 = scalar_select %p38, %s37, 0
    %s40 = smul.addr %s39, 8
    %s41 = scalar_lea.vmem %s0, %s40
    %s42 = sadd.s32 0, 0
    %p43 = scmp.lt.s32.totalorder %s42, 0
    %s44 = scalar_select %p43, %s42, 0
    %p45 = scmp.lt.s32.totalorder %s44, 0
    %s46 = scalar_select %p45, %s44, 0
    %s47 = smul.addr %s46, 8
    %s48 = scalar_lea.vmem %s1, %s47
    %s49 = sadd.s32 0, 0
    %p50 = scmp.lt.s32.totalorder %s49, 0
    %s51 = scalar_select %p50, %s49, 0
    %p52 = scmp.lt.s32.totalorder %s51, 0
    %s53 = scalar_select %p52, %s51, 0
    %s54 = smul.addr %s53, 8
    %s55 = scalar_lea.vmem %s0, %s54
    %s56 = sadd.s32 0, 0
    %p57 = scmp.lt.s32.totalorder %s56, 0
    %s58 = scalar_select %p57, %s56, 0
    %s59 = sadd.s32 0, 0
    %p60 = scmp.lt.s32.totalorder %s59, 0
    %s61 = scalar_select %p60, %s59, 0
    %p62 = scmp.lt.s32.totalorder %s61, 0
    %s63 = scalar_select %p62, %s61, 0
    %s64 = smul.addr %s63, 8
    %s65 = scalar_lea.vmem %s1, %s64
    %s66 = sadd.s32 0, 0
    %p67 = scmp.lt.s32.totalorder %s66, 0
    %s68 = scalar_select %p67, %s66, 0
    %p69 = scmp.eq.s32.totalorder 0, 0
    // Predicated region
    $region14: #{tpu_custom_call.1} parent=1 // pred_check
      %p70 = pneg %p69
    $region15: #{tpu_custom_call.1} parent=1 // pred_check_branch
      %72 = sbr.rel (%p70) target = $region17
    $region16: #{tpu_custom_call.1} parent=1 // pred_region
      %vm73 = vcmask 261120
      %74 = vst.msk [vmem:[#allocation2] sm:$0xff] %vm73, 0.0
    $region17: #{tpu_custom_call.1} parent=1 // pred_fallthru
      _
    %v75 = vld [vmem:[%s55] sm:$0xff]
    %v76 = vld [vmem:[%s65] sm:$0xff]
    %v77 = vlaneseq
    %v78 = vand.u32 %v77, 127
    %79 = vset.pattern.permute.xlu0 0
    %80 = vperm.xlu0 %79, %v76
    %v81 = vpop.permute.xlu0 %80
    %vm82 = vcmp.eq.s32.totalorder %v78, %v81
    %v83 = vsub.f32 1.0, %v75
    %v84 = vsel %vm82, %v75, %v83
    %v85 = vlog2.pop %v84
    %v86 = vmul.f32 %v85, 0.6931472
    %v87 = vmax.f32 %v86, -100.0
    %s88 = sadd.s32 0, 0
    %s89 = smul.u32 %s88, 8
    %v90 = vlaneseq
    %v91 = vshrl.u32 %v90, 7
    %v92 = vstv %s89
    %v93 = vadd.s32 %v92, %v91
    %vm94 = vcmp.lt.s32.totalorder %v93, 8
    %v95 = vsel %vm94, 1, 0
    %vm96 = vcmp.eq.s32.totalorder %v95, 1
    %v97 = vsel %vm96, %v87, 0.0
    %v98 = vld [vmem:[#allocation2] sm:$0xff]
    %v99 = vadd.f32 %v97, 0.0
    %v100 = vadd.f32 %v98, %v99
    %vm101 = vcmask 261120
    %102 = vst.msk [vmem:[#allocation2] sm:$0xff] %vm101, %v100
    // Predicated region
    $region18: #{tpu_custom_call.1} parent=1 // pred_check
      %p103 = pneg %p69
    $region19: #{tpu_custom_call.1} parent=1 // pred_check_branch
      %105 = sbr.rel (%p103) target = $region21
    $region20: #{tpu_custom_call.1} parent=1 // pred_region
      %v106 = vld [vmem:[%s2] sm:$0x1]
      %v107 = vld [vmem:[#allocation2] sm:$0xff]
      %v109 = vlaneseq
      %v110 = vshrl.u32 %v109, 7
      %v111 = vsub.s32 0, %v110
      %v112 = vrot.slane %v106, %v111
      %v114 = vmul.f32 %v107, %v112
      %v115 = vsel %vm101, %v114, 0.0
      %116 = vadd.xlane.f32.xlu0 %v115
      %v117 = vpop.xlane.xlu0 %116
      %v118 = vrot.slane %v117, 4
      %v119 = vadd.f32 %v117, %v118
      %v120 = vrot.slane %v119, 2
      %v121 = vadd.f32 %v119, %v120
      %v122 = vrot.slane %v121, 1
      %v123 = vadd.f32 %v121, %v122
      %s124 = vtos %v123
      %s125 = ssub.f32 0.0, %s124
      %s126 = smul.f32 %s125, 0.00390625
      %v127 = vstv %s126
      %128 = vst [vmem:[#allocation3] sm:$0xff] %v127
    $region21: #{tpu_custom_call.1} parent=1 // pred_fallthru
      _
    // Predicated region
    $region22: #{tpu_custom_call.1} parent=1 // pred_check
      _
    $region23: #{tpu_custom_call.1} parent=1 // pred_check_branch
      %130 = sbr.rel (0) target = $region25
    $region24: #{tpu_custom_call.1} parent=1 // pred_region
      %s132 = ssub.s32 128, 128
      %133 = vsyncadd [#allocation4], %s132
      %s135 = sshll.u32 [#allocation3], 4
      %s136 = int_to_ptr.vmem [resolvable:$true] %s135
      %138 = dma.vmem_to_hbm [thread:$0]  %s136, 128, %s3, [#allocation4]
    $region25: #{tpu_custom_call.1} parent=1 // pred_fallthru
      _
    // Predicated region
    $region26: #{tpu_custom_call.1} parent=1 // pred_check
      _
    $region27: #{tpu_custom_call.1} parent=1 // pred_check_branch
      %140 = sbr.rel (0) target = $region29
    $region28: #{tpu_custom_call.1} parent=1 // pred_region
      %141 = dma.done [#allocation4], 128
    $region29: #{tpu_custom_call.1} parent=1 // pred_fallthru
      _
    %142 = vsyncpa [#allocation4], 1

</llo_original>
